<compile_context>
chip_gen: v6e
topology: v6e:2x2x1
jax: 0.10.0
libtpu: 0.0.40
codegen_flags: <defaults>
</compile_context>

<pallas_src>
import functools

import jax
import jax.numpy as jnp
from jax.experimental import pallas as pl
from jax.experimental.pallas import tpu as pltpu


def _cbam_kernel(x_ref, w_ref, b_ref, taps_ref, masks_ref, out_ref, *, C, H, W, K):
    """Fused CBAM forward for one batch element, flat lane-dense (C, HW) layout.

    x_ref:     (1, C, HW) VMEM  input block (channels on sublanes, HW on lanes)
    w_ref:     (C, C)     VMEM  1x1-conv weight (untransposed), DMA'd once
    b_ref:     (C, 1)     VMEM  1x1-conv bias, channel-oriented
    taps_ref:  (2K, K)    VMEM  spatial-conv taps; row 2*i+c = sa_w[c, i, :]
    masks_ref: (2K, HW)   VMEM  float 0/1 masks; rows 0..K-1 row masks (di=i-p),
                                rows K..2K-1 column masks (dj=j-p)
    out_ref:   (1, C, HW) VMEM  output block
    """
    HW = H * W
    p = K // 2

    x = x_ref[0].astype(jnp.float32)                              # (C, HW)

    # ---- Channel attention: global avg pool (lane reduce) + 1x1 conv as MXU matvec.
    pooled = jnp.mean(x, axis=1, keepdims=True)                   # (C, 1)
    z = jnp.dot(w_ref[...], pooled,
                preferred_element_type=jnp.float32) + b_ref[...]  # (C, 1), sublane-oriented
    ca = jax.nn.sigmoid(z)                                        # (C, 1)
    x1 = x * ca                                                   # (C, HW)

    # ---- Channel-wise mean / max maps, stacked into one (2, HW) block.
    mean_c = jnp.mean(x1, axis=0, keepdims=True)                  # (1, HW)
    max_c = jnp.max(x1, axis=0, keepdims=True)                    # (1, HW)
    mm = jnp.concatenate([mean_c, max_c], axis=0)                 # (2, HW)

    # ---- Row factor: K lane-rolls of the (2, HW) stack (shift = whole rows),
    #      row-boundary masks folded in as float multiplies while building.
    pieces = []
    for i in range(K):
        di = i - p
        shift = (-(di * W)) % HW          # r[q] = v[q + di*W]  (jnp.roll semantics)
        rolled = mm if shift == 0 else pltpu.roll(mm, shift, axis=1)
        pieces.append(rolled * masks_ref[i:i + 1, :])
    stack = jnp.concatenate(pieces, axis=0)                       # (2K, HW)

    # ---- Column factor: ONE lane-roll of the whole stack per dj, tap-weighted
    #      sublane reduce, float column mask.  Out-of-image taps are exactly the
    #      positions the masks zero (roll wrap-around lands only on masked lanes).
    acc = jnp.zeros((1, HW), jnp.float32)
    for j in range(K):
        dj = j - p
        shift = (-dj) % HW                # t[k, q] = stack[k, q + dj]
        t = stack if shift == 0 else pltpu.roll(stack, shift, axis=1)
        contrib = jnp.sum(t * taps_ref[:, j:j + 1], axis=0, keepdims=True)  # (1, HW)
        acc = acc + masks_ref[K + j:K + j + 1, :] * contrib

    s = jax.nn.sigmoid(acc)                                       # (1, HW)
    # Single unmasked lane-dense store (HW is a multiple of 128).
    out_ref[0] = (x1 * s).astype(out_ref.dtype)


def cbam_forward(x, fc_w, fc_b, sa_w, kernel_size=7):
    assert kernel_size in (3, 7)
    N, C, H, W = x.shape
    HW = H * W
    K = kernel_size
    p = K // 2

    # Lane-dense layout: channels on sublanes, flattened spatial (HW) on lanes.
    x_flat = x.reshape(N, C, HW)

    # Tap matrix matching the interleaved [mean(di), max(di)] stack row order:
    # taps[2*i + c, j] = sa_w[c, i, j].
    taps = jnp.transpose(sa_w.astype(jnp.float32), (1, 0, 2)).reshape(2 * K, K)

    # Precomputed float boundary masks (computed once in XLA, DMA'd once into VMEM).
    q = jnp.arange(HW, dtype=jnp.int32)
    row_idx = q // W
    col_idx = q % W
    row_m = jnp.stack([((row_idx + (i - p)) >= 0) & ((row_idx + (i - p)) < H)
                       for i in range(K)])                        # (K, HW)
    col_m = jnp.stack([((col_idx + (j - p)) >= 0) & ((col_idx + (j - p)) < W)
                       for j in range(K)])                        # (K, HW)
    masks = jnp.concatenate([row_m, col_m], axis=0).astype(jnp.float32)   # (2K, HW)

    kernel = functools.partial(_cbam_kernel, C=C, H=H, W=W, K=K)

    cost = pl.CostEstimate(
        flops=int(N * (2 * C * C + 5 * C * HW + (4 * K * K + 2 * K) * HW)),
        transcendentals=int(N * (C + HW)),
        bytes_accessed=int(2 * N * C * HW * x.dtype.itemsize
                           + (C * C + C + 2 * K * K + 2 * K * HW) * 4),
    )

    out_flat = pl.pallas_call(
        kernel,
        grid=(N,),
        in_specs=[
            pl.BlockSpec((1, C, HW), lambda n: (n, 0, 0)),
            pl.BlockSpec((C, C), lambda n: (0, 0)),       # constant index -> DMA'd once
            pl.BlockSpec((C, 1), lambda n: (0, 0)),       # bias, channel-oriented
            pl.BlockSpec((2 * K, K), lambda n: (0, 0)),   # spatial taps
            pl.BlockSpec((2 * K, HW), lambda n: (0, 0)),  # boundary masks
        ],
        out_specs=pl.BlockSpec((1, C, HW), lambda n: (n, 0, 0)),
        out_shape=jax.ShapeDtypeStruct((N, C, HW), x.dtype),
        compiler_params=pltpu.CompilerParams(dimension_semantics=("parallel",)),
        cost_estimate=cost,
    )(x_flat,
      fc_w.astype(jnp.float32),
      fc_b.astype(jnp.float32).reshape(C, 1),
      taps,
      masks)
    return out_flat.reshape(N, C, H, W)


def cbam_reference(x, fc_w, fc_b, sa_w, kernel_size=7):
    """Pure-JAX reference mirroring the PyTorch forward semantics."""
    N, C, H, W = x.shape
    p = kernel_size // 2
    pooled = jnp.mean(x, axis=(2, 3))                            # (N, C)
    z = pooled @ fc_w.T + fc_b
    ca = jax.nn.sigmoid(z)[:, :, None, None]
    x1 = x * ca
    mean_c = jnp.mean(x1, axis=1, keepdims=True)
    max_c = jnp.max(x1, axis=1, keepdims=True)
    cat = jnp.concatenate([mean_c, max_c], axis=1)               # (N, 2, H, W)
    catp = jnp.pad(cat, ((0, 0), (0, 0), (p, p), (p, p)))
    acc = jnp.zeros((N, H, W), jnp.float32)
    for c in range(2):
        for i in range(kernel_size):
            for j in range(kernel_size):
                acc = acc + sa_w[c, i, j] * catp[:, c, i:i + H, j:j + W]
    s = jax.nn.sigmoid(acc)[:, None, :, :]
    return x1 * s


if __name__ == "__main__":
    key = jax.random.PRNGKey(0)
    kx, kw, kb, ks = jax.random.split(key, 4)
    N, C, H, W = 2, 4, 16, 16

    x = jax.random.normal(kx, (N, C, H, W), jnp.float32)
    # ChannelAttention.fc: Conv2d(C, C, 1, bias=True) -> weight (C, C), bias (C,)
    fc_w = 0.3 * jax.random.normal(kw, (C, C), jnp.float32)
    fc_b = 0.1 * jax.random.normal(kb, (C,), jnp.float32)
    # SpatialAttention.cv1: Conv2d(2, 1, 7, padding=3, bias=False) -> weight (2, 7, 7)
    sa_w = 0.2 * jax.random.normal(ks, (2, 7, 7), jnp.float32)

    out = jax.block_until_ready(cbam_forward(x, fc_w, fc_b, sa_w, kernel_size=7))
    ref = cbam_reference(x, fc_w, fc_b, sa_w, kernel_size=7)

    assert out.shape == (N, C, H, W)
    max_err = float(jnp.max(jnp.abs(out - ref)))
    assert jnp.allclose(out, ref, atol=1e-4, rtol=1e-4), f"max_err={max_err}"
    print("KERNEL_OK")
</pallas_src>

<mosaic_0001>
module attributes {stable_mosaic.version = 11 : i64} {
  func.func @_cbam_kernel(%arg0: i32, %arg1: memref<1x4x256xf32, #tpu.memory_space<vmem>>, %arg2: memref<4x4xf32, #tpu.memory_space<vmem>>, %arg3: memref<4x1xf32, #tpu.memory_space<vmem>>, %arg4: memref<14x7xf32, #tpu.memory_space<vmem>>, %arg5: memref<14x256xf32, #tpu.memory_space<vmem>>, %arg6: memref<1x4x256xf32, #tpu.memory_space<vmem>>) attributes {dimension_semantics = [#tpu.dimension_semantics<parallel>], iteration_bounds = array<i64: 2>, scalar_prefetch = 0 : i64, scratch_operands = 0 : i64, tpu.core_type = #tpu.core_type<tc>, window_params = [{transform_indices = @transform_0, window_bounds = array<i64: 1, 4, 256>}, {pipeline_mode = #tpu.pipeline_mode<synchronous>, transform_indices = @transform_1, window_bounds = array<i64: 4, 4>}, {pipeline_mode = #tpu.pipeline_mode<synchronous>, transform_indices = @transform_2, window_bounds = array<i64: 4, 1>}, {pipeline_mode = #tpu.pipeline_mode<synchronous>, transform_indices = @transform_3, window_bounds = array<i64: 14, 7>}, {pipeline_mode = #tpu.pipeline_mode<synchronous>, transform_indices = @transform_4, window_bounds = array<i64: 14, 256>}, {transform_indices = @transform_5, window_bounds = array<i64: 1, 4, 256>}]} {
    %c0 = arith.constant 0 : index
    %c0_0 = arith.constant 0 : index
    %c0_1 = arith.constant 0 : index
    %0 = vector.load %arg1[%c0, %c0_0, %c0_1] : memref<1x4x256xf32, #tpu.memory_space<vmem>>, vector<1x4x256xf32>
    %1 = vector.shape_cast %0 : vector<1x4x256xf32> to vector<4x256xf32>
    %cst = arith.constant dense<0.000000e+00> : vector<4xf32>
    %2 = vector.multi_reduction <add>, %1, %cst [1] : vector<4x256xf32> to vector<4xf32>
    %3 = vector.shape_cast %2 : vector<4xf32> to vector<4x1xf32>
    %cst_2 = arith.constant 2.560000e+02 : f32
    %4 = vector.broadcast %cst_2 : f32 to vector<4x1xf32>
    %5 = arith.divf %3, %4 : vector<4x1xf32>
    %c0_3 = arith.constant 0 : index
    %c0_4 = arith.constant 0 : index
    %6 = vector.load %arg2[%c0_3, %c0_4] : memref<4x4xf32, #tpu.memory_space<vmem>>, vector<4x4xf32>
    %cst_5 = arith.constant dense<0.000000e+00> : vector<4x1xf32>
    %7 = tpu.matmul %6, %5, %cst_5 {dimension_numbers = #tpu.dot_dimension_numbers<[1], [0], [0], [1], [0, 0, 1, 1], [], []>} : vector<4x4xf32>, vector<4x1xf32>, vector<4x1xf32> -> vector<4x1xf32>
    %c0_6 = arith.constant 0 : index
    %c0_7 = arith.constant 0 : index
    %8 = vector.load %arg3[%c0_6, %c0_7] : memref<4x1xf32, #tpu.memory_space<vmem>>, vector<4x1xf32>
    %9 = arith.addf %7, %8 : vector<4x1xf32>
    %10 = arith.negf %9 : vector<4x1xf32>
    %11 = math.exp %10 : vector<4x1xf32>
    %cst_8 = arith.constant 1.000000e+00 : f32
    %12 = vector.broadcast %cst_8 : f32 to vector<4x1xf32>
    %13 = arith.addf %12, %11 : vector<4x1xf32>
    %14 = arith.divf %12, %13 : vector<4x1xf32>
    %15 = vector.broadcast %14 : vector<4x1xf32> to vector<4x256xf32>
    %16 = arith.mulf %1, %15 : vector<4x256xf32>
    %cst_9 = arith.constant dense<0.000000e+00> : vector<256xf32>
    %17 = vector.multi_reduction <add>, %16, %cst_9 [0] : vector<4x256xf32> to vector<256xf32>
    %18 = vector.shape_cast %17 : vector<256xf32> to vector<1x256xf32>
    %cst_10 = arith.constant 4.000000e+00 : f32
    %19 = vector.broadcast %cst_10 : f32 to vector<1x256xf32>
    %20 = arith.divf %18, %19 : vector<1x256xf32>
    %cst_11 = arith.constant dense<0xFF800000> : vector<256xf32>
    %21 = vector.multi_reduction <maximumf>, %16, %cst_11 [0] : vector<4x256xf32> to vector<256xf32>
    %22 = vector.shape_cast %21 : vector<256xf32> to vector<1x256xf32>
    %23 = tpu.concatenate %20, %22 in 0 : vector<1x256xf32>, vector<1x256xf32> -> vector<2x256xf32>
    %c48_i32 = arith.constant 48 : i32
    %24 = tpu.dynamic_rotate %23 by %c48_i32 dim 1 : vector<2x256xf32>, i32 -> vector<2x256xf32>
    %c0_12 = arith.constant 0 : index
    %c0_13 = arith.constant 0 : index
    %25 = vector.load %arg5[%c0_12, %c0_13] : memref<14x256xf32, #tpu.memory_space<vmem>>, vector<1x256xf32>
    %26 = vector.broadcast %25 : vector<1x256xf32> to vector<2x256xf32>
    %27 = arith.mulf %24, %26 : vector<2x256xf32>
    %c32_i32 = arith.constant 32 : i32
    %28 = tpu.dynamic_rotate %23 by %c32_i32 dim 1 : vector<2x256xf32>, i32 -> vector<2x256xf32>
    %c1 = arith.constant 1 : index
    %c0_14 = arith.constant 0 : index
    %29 = vector.load %arg5[%c1, %c0_14] : memref<14x256xf32, #tpu.memory_space<vmem>>, vector<1x256xf32>
    %30 = vector.broadcast %29 : vector<1x256xf32> to vector<2x256xf32>
    %31 = arith.mulf %28, %30 : vector<2x256xf32>
    %c16_i32 = arith.constant 16 : i32
    %32 = tpu.dynamic_rotate %23 by %c16_i32 dim 1 : vector<2x256xf32>, i32 -> vector<2x256xf32>
    %c2 = arith.constant 2 : index
    %c0_15 = arith.constant 0 : index
    %33 = vector.load %arg5[%c2, %c0_15] : memref<14x256xf32, #tpu.memory_space<vmem>>, vector<1x256xf32>
    %34 = vector.broadcast %33 : vector<1x256xf32> to vector<2x256xf32>
    %35 = arith.mulf %32, %34 : vector<2x256xf32>
    %c3 = arith.constant 3 : index
    %c0_16 = arith.constant 0 : index
    %36 = vector.load %arg5[%c3, %c0_16] : memref<14x256xf32, #tpu.memory_space<vmem>>, vector<1x256xf32>
    %37 = vector.broadcast %36 : vector<1x256xf32> to vector<2x256xf32>
    %38 = arith.mulf %23, %37 : vector<2x256xf32>
    %c240_i32 = arith.constant 240 : i32
    %39 = tpu.dynamic_rotate %23 by %c240_i32 dim 1 : vector<2x256xf32>, i32 -> vector<2x256xf32>
    %c4 = arith.constant 4 : index
    %c0_17 = arith.constant 0 : index
    %40 = vector.load %arg5[%c4, %c0_17] : memref<14x256xf32, #tpu.memory_space<vmem>>, vector<1x256xf32>
    %41 = vector.broadcast %40 : vector<1x256xf32> to vector<2x256xf32>
    %42 = arith.mulf %39, %41 : vector<2x256xf32>
    %c224_i32 = arith.constant 224 : i32
    %43 = tpu.dynamic_rotate %23 by %c224_i32 dim 1 : vector<2x256xf32>, i32 -> vector<2x256xf32>
    %c5 = arith.constant 5 : index
    %c0_18 = arith.constant 0 : index
    %44 = vector.load %arg5[%c5, %c0_18] : memref<14x256xf32, #tpu.memory_space<vmem>>, vector<1x256xf32>
    %45 = vector.broadcast %44 : vector<1x256xf32> to vector<2x256xf32>
    %46 = arith.mulf %43, %45 : vector<2x256xf32>
    %c208_i32 = arith.constant 208 : i32
    %47 = tpu.dynamic_rotate %23 by %c208_i32 dim 1 : vector<2x256xf32>, i32 -> vector<2x256xf32>
    %c6 = arith.constant 6 : index
    %c0_19 = arith.constant 0 : index
    %48 = vector.load %arg5[%c6, %c0_19] : memref<14x256xf32, #tpu.memory_space<vmem>>, vector<1x256xf32>
    %49 = vector.broadcast %48 : vector<1x256xf32> to vector<2x256xf32>
    %50 = arith.mulf %47, %49 : vector<2x256xf32>
    %51 = tpu.concatenate %27, %31, %35, %38, %42, %46, %50 in 0 : vector<2x256xf32>, vector<2x256xf32>, vector<2x256xf32>, vector<2x256xf32>, vector<2x256xf32>, vector<2x256xf32>, vector<2x256xf32> -> vector<14x256xf32>
    %cst_20 = arith.constant 0.000000e+00 : f32
    %52 = vector.broadcast %cst_20 : f32 to vector<1x256xf32>
    %c3_i32 = arith.constant 3 : i32
    %53 = tpu.dynamic_rotate %51 by %c3_i32 dim 1 : vector<14x256xf32>, i32 -> vector<14x256xf32>
    %c0_21 = arith.constant 0 : index
    %c0_22 = arith.constant 0 : index
    %54 = vector.load %arg4[%c0_21, %c0_22] : memref<14x7xf32, #tpu.memory_space<vmem>>, vector<14x1xf32>
    %55 = vector.broadcast %54 : vector<14x1xf32> to vector<14x256xf32>
    %56 = arith.mulf %53, %55 : vector<14x256xf32>
    %cst_23 = arith.constant dense<0.000000e+00> : vector<256xf32>
    %57 = vector.multi_reduction <add>, %56, %cst_23 [0] : vector<14x256xf32> to vector<256xf32>
    %58 = vector.shape_cast %57 : vector<256xf32> to vector<1x256xf32>
    %c7 = arith.constant 7 : index
    %c0_24 = arith.constant 0 : index
    %59 = vector.load %arg5[%c7, %c0_24] : memref<14x256xf32, #tpu.memory_space<vmem>>, vector<1x256xf32>
    %60 = arith.mulf %59, %58 : vector<1x256xf32>
    %61 = arith.addf %52, %60 : vector<1x256xf32>
    %c2_i32 = arith.constant 2 : i32
    %62 = tpu.dynamic_rotate %51 by %c2_i32 dim 1 : vector<14x256xf32>, i32 -> vector<14x256xf32>
    %c0_25 = arith.constant 0 : index
    %c1_26 = arith.constant 1 : index
    %63 = vector.load %arg4[%c0_25, %c1_26] : memref<14x7xf32, #tpu.memory_space<vmem>>, vector<14x1xf32>
    %64 = vector.broadcast %63 : vector<14x1xf32> to vector<14x256xf32>
    %65 = arith.mulf %62, %64 : vector<14x256xf32>
    %cst_27 = arith.constant dense<0.000000e+00> : vector<256xf32>
    %66 = vector.multi_reduction <add>, %65, %cst_27 [0] : vector<14x256xf32> to vector<256xf32>
    %67 = vector.shape_cast %66 : vector<256xf32> to vector<1x256xf32>
    %c8 = arith.constant 8 : index
    %c0_28 = arith.constant 0 : index
    %68 = vector.load %arg5[%c8, %c0_28] : memref<14x256xf32, #tpu.memory_space<vmem>>, vector<1x256xf32>
    %69 = arith.mulf %68, %67 : vector<1x256xf32>
    %70 = arith.addf %61, %69 : vector<1x256xf32>
    %c1_i32 = arith.constant 1 : i32
    %71 = tpu.dynamic_rotate %51 by %c1_i32 dim 1 : vector<14x256xf32>, i32 -> vector<14x256xf32>
    %c0_29 = arith.constant 0 : index
    %c2_30 = arith.constant 2 : index
    %72 = vector.load %arg4[%c0_29, %c2_30] : memref<14x7xf32, #tpu.memory_space<vmem>>, vector<14x1xf32>
    %73 = vector.broadcast %72 : vector<14x1xf32> to vector<14x256xf32>
    %74 = arith.mulf %71, %73 : vector<14x256xf32>
    %cst_31 = arith.constant dense<0.000000e+00> : vector<256xf32>
    %75 = vector.multi_reduction <add>, %74, %cst_31 [0] : vector<14x256xf32> to vector<256xf32>
    %76 = vector.shape_cast %75 : vector<256xf32> to vector<1x256xf32>
    %c9 = arith.constant 9 : index
    %c0_32 = arith.constant 0 : index
    %77 = vector.load %arg5[%c9, %c0_32] : memref<14x256xf32, #tpu.memory_space<vmem>>, vector<1x256xf32>
    %78 = arith.mulf %77, %76 : vector<1x256xf32>
    %79 = arith.addf %70, %78 : vector<1x256xf32>
    %c0_33 = arith.constant 0 : index
    %c3_34 = arith.constant 3 : index
    %80 = vector.load %arg4[%c0_33, %c3_34] : memref<14x7xf32, #tpu.memory_space<vmem>>, vector<14x1xf32>
    %81 = vector.broadcast %80 : vector<14x1xf32> to vector<14x256xf32>
    %82 = arith.mulf %51, %81 : vector<14x256xf32>
    %cst_35 = arith.constant dense<0.000000e+00> : vector<256xf32>
    %83 = vector.multi_reduction <add>, %82, %cst_35 [0] : vector<14x256xf32> to vector<256xf32>
    %84 = vector.shape_cast %83 : vector<256xf32> to vector<1x256xf32>
    %c10 = arith.constant 10 : index
    %c0_36 = arith.constant 0 : index
    %85 = vector.load %arg5[%c10, %c0_36] : memref<14x256xf32, #tpu.memory_space<vmem>>, vector<1x256xf32>
    %86 = arith.mulf %85, %84 : vector<1x256xf32>
    %87 = arith.addf %79, %86 : vector<1x256xf32>
    %c255_i32 = arith.constant 255 : i32
    %88 = tpu.dynamic_rotate %51 by %c255_i32 dim 1 : vector<14x256xf32>, i32 -> vector<14x256xf32>
    %c0_37 = arith.constant 0 : index
    %c4_38 = arith.constant 4 : index
    %89 = vector.load %arg4[%c0_37, %c4_38] : memref<14x7xf32, #tpu.memory_space<vmem>>, vector<14x1xf32>
    %90 = vector.broadcast %89 : vector<14x1xf32> to vector<14x256xf32>
    %91 = arith.mulf %88, %90 : vector<14x256xf32>
    %cst_39 = arith.constant dense<0.000000e+00> : vector<256xf32>
    %92 = vector.multi_reduction <add>, %91, %cst_39 [0] : vector<14x256xf32> to vector<256xf32>
    %93 = vector.shape_cast %92 : vector<256xf32> to vector<1x256xf32>
    %c11 = arith.constant 11 : index
    %c0_40 = arith.constant 0 : index
    %94 = vector.load %arg5[%c11, %c0_40] : memref<14x256xf32, #tpu.memory_space<vmem>>, vector<1x256xf32>
    %95 = arith.mulf %94, %93 : vector<1x256xf32>
    %96 = arith.addf %87, %95 : vector<1x256xf32>
    %c254_i32 = arith.constant 254 : i32
    %97 = tpu.dynamic_rotate %51 by %c254_i32 dim 1 : vector<14x256xf32>, i32 -> vector<14x256xf32>
    %c0_41 = arith.constant 0 : index
    %c5_42 = arith.constant 5 : index
    %98 = vector.load %arg4[%c0_41, %c5_42] : memref<14x7xf32, #tpu.memory_space<vmem>>, vector<14x1xf32>
    %99 = vector.broadcast %98 : vector<14x1xf32> to vector<14x256xf32>
    %100 = arith.mulf %97, %99 : vector<14x256xf32>
    %cst_43 = arith.constant dense<0.000000e+00> : vector<256xf32>
    %101 = vector.multi_reduction <add>, %100, %cst_43 [0] : vector<14x256xf32> to vector<256xf32>
    %102 = vector.shape_cast %101 : vector<256xf32> to vector<1x256xf32>
    %c12 = arith.constant 12 : index
    %c0_44 = arith.constant 0 : index
    %103 = vector.load %arg5[%c12, %c0_44] : memref<14x256xf32, #tpu.memory_space<vmem>>, vector<1x256xf32>
    %104 = arith.mulf %103, %102 : vector<1x256xf32>
    %105 = arith.addf %96, %104 : vector<1x256xf32>
    %c253_i32 = arith.constant 253 : i32
    %106 = tpu.dynamic_rotate %51 by %c253_i32 dim 1 : vector<14x256xf32>, i32 -> vector<14x256xf32>
    %c0_45 = arith.constant 0 : index
    %c6_46 = arith.constant 6 : index
    %107 = vector.load %arg4[%c0_45, %c6_46] : memref<14x7xf32, #tpu.memory_space<vmem>>, vector<14x1xf32>
    %108 = vector.broadcast %107 : vector<14x1xf32> to vector<14x256xf32>
    %109 = arith.mulf %106, %108 : vector<14x256xf32>
    %cst_47 = arith.constant dense<0.000000e+00> : vector<256xf32>
    %110 = vector.multi_reduction <add>, %109, %cst_47 [0] : vector<14x256xf32> to vector<256xf32>
    %111 = vector.shape_cast %110 : vector<256xf32> to vector<1x256xf32>
    %c13 = arith.constant 13 : index
    %c0_48 = arith.constant 0 : index
    %112 = vector.load %arg5[%c13, %c0_48] : memref<14x256xf32, #tpu.memory_space<vmem>>, vector<1x256xf32>
    %113 = arith.mulf %112, %111 : vector<1x256xf32>
    %114 = arith.addf %105, %113 : vector<1x256xf32>
    %115 = arith.negf %114 : vector<1x256xf32>
    %116 = math.exp %115 : vector<1x256xf32>
    %cst_49 = arith.constant 1.000000e+00 : f32
    %117 = vector.broadcast %cst_49 : f32 to vector<1x256xf32>
    %118 = arith.addf %117, %116 : vector<1x256xf32>
    %119 = arith.divf %117, %118 : vector<1x256xf32>
    %120 = vector.broadcast %119 : vector<1x256xf32> to vector<4x256xf32>
    %121 = arith.mulf %16, %120 : vector<4x256xf32>
    %c0_50 = arith.constant 0 : index
    %c0_51 = arith.constant 0 : index
    %c0_52 = arith.constant 0 : index
    %122 = vector.load %arg6[%c0_50, %c0_51, %c0_52] : memref<1x4x256xf32, #tpu.memory_space<vmem>>, vector<1x4x256xf32>
    %123 = vector.shape_cast %122 : vector<1x4x256xf32> to vector<4x256xf32>
    %124 = vector.shape_cast %121 : vector<4x256xf32> to vector<1x4x256xf32>
    tpu.vector_store %arg6[%c0_50, %c0_51, %c0_52], %124 {strides = array<i32>} : memref<1x4x256xf32, #tpu.memory_space<vmem>>, vector<1x4x256xf32>,
    return
  }
  func.func @transform_0(%arg0: i32) -> (i32, i32, i32) {
    %c0_i32 = arith.constant 0 : i32
    %c0_i32_0 = arith.constant 0 : i32
    %c0_i32_1 = arith.constant 0 : i32
    return %arg0, %c0_i32, %c0_i32_0 : i32, i32, i32
  }
  func.func @transform_1(%arg0: i32) -> (i32, i32) {
    %c0_i32 = arith.constant 0 : i32
    %c0_i32_0 = arith.constant 0 : i32
    %c0_i32_1 = arith.constant 0 : i32
    return %c0_i32, %c0_i32_0 : i32, i32
  }
  func.func @transform_2(%arg0: i32) -> (i32, i32) {
    %c0_i32 = arith.constant 0 : i32
    %c0_i32_0 = arith.constant 0 : i32
    %c0_i32_1 = arith.constant 0 : i32
    return %c0_i32, %c0_i32_0 : i32, i32
  }
  func.func @transform_3(%arg0: i32) -> (i32, i32) {
    %c0_i32 = arith.constant 0 : i32
    %c0_i32_0 = arith.constant 0 : i32
    %c0_i32_1 = arith.constant 0 : i32
    return %c0_i32, %c0_i32_0 : i32, i32
  }
  func.func @transform_4(%arg0: i32) -> (i32, i32) {
    %c0_i32 = arith.constant 0 : i32
    %c0_i32_0 = arith.constant 0 : i32
    %c0_i32_1 = arith.constant 0 : i32
    return %c0_i32, %c0_i32_0 : i32, i32
  }
  func.func @transform_5(%arg0: i32) -> (i32, i32, i32) {
    %c0_i32 = arith.constant 0 : i32
    %c0_i32_0 = arith.constant 0 : i32
    %c0_i32_1 = arith.constant 0 : i32
    return %arg0, %c0_i32, %c0_i32_0 : i32, i32, i32
  }
}

</mosaic_0001>

<llo_original>
// kernel: tpu_custom_call.1
$region0: #{tpu_custom_call.1}
  #allocation0 [shape = 'u32[]', space=smem, size = 0x4, offset = 0x4, fixed_abs, tag = 'smem constant byte address 0x4 - core index']
  #allocation1 [shape = 'u32[144,128]{1,0:T(1,128)}', space=vmem, size = 0x12000, scoped, tag = 'internal scratch']
  %s0 = inlined_call_operand.hbm [shape: f32[2,4,256], index: 0, kind: input, shape index: {}]
  %s1 = inlined_call_operand.vmem [shape: f32[4,4], index: 1, kind: input, shape index: {}]
  %s2 = inlined_call_operand.vmem [shape: f32[4,1], index: 2, kind: input, shape index: {}]
  %s3 = inlined_call_operand.vmem [shape: f32[14,7], index: 3, kind: input, shape index: {}]
  %s4 = inlined_call_operand.vmem [shape: f32[14,256], index: 4, kind: input, shape index: {}]
  %s5 = inlined_call_operand.hbm [shape: f32[2,4,256], index: 5, kind: output, shape index: {}]
  %s6 = sld [smem:[#allocation0]]
  $region57: #{tpu_custom_call.1} parent=0
    _
  %s8 = ssub.s32 1, %s6
  %s9 = scalar_select 0, %s8, %s6
  $region1: #{tpu_custom_call.1} parent=0
    #allocation2 [shape = 'u8[8192]{0}', space=vmem, size = 0x2000, scoped, tag = 'input window, operand 0']
    #allocation3 [shape = 's32[2]{0}', space=sflag, size = 0x8, scoped, tag = 'scoped memory for tpu_custom_call.1']
    #allocation4 [shape = 's32[2]{0}', space=sflag, size = 0x8, scoped, tag = 'scoped memory for tpu_custom_call.1']
    #allocation5 [shape = 'u8[8192]{0}', space=vmem, size = 0x2000, scoped, tag = 'output window, operand 0']
    %10 = vsyncpa [#allocation3], 0
    %s11 = scalar_lea.sflag [#allocation3], 1
    %12 = vsyncpa %s11, 0
    %13 = vsyncpa [#allocation4], 0
    %s14 = scalar_lea.sflag [#allocation4], 1
    %15 = vsyncpa %s14, 0
    loop: start=0, step=1, limit=4
    $region2: #{tpu_custom_call.1} parent=1 // loop_pre_header
      _
    $region3: #{tpu_custom_call.1} parent=1 // loop_header
      %s17 = sphi 0, %s21
      %p18 = scmp.ge.s32.totalorder %s17, 4
      %s27 = sphi 0, %s29
      %s30 = sphi 0, %s27
      %s31 = sphi 0, %s30
      %s47 = sphi 0, %s31
      %s51 = sphi 0, %s51
      %s53 = sphi 0, %s51
      %s54 = sphi 0, %s53
      %s68 = sphi 0, %s54
      %s72 = sphi 0, %s72
      %s74 = sphi 0, %s72
      %s75 = sphi 0, %s74
      %s89 = sphi 0, %s75
      %s93 = sphi 0, %s93
      %s95 = sphi 0, %s93
      %s96 = sphi 0, %s95
      %s110 = sphi 0, %s96
      %s114 = sphi 0, %s114
      %s116 = sphi 0, %s114
      %s117 = sphi 0, %s116
      %s131 = sphi 0, %s117
      %s137 = sphi 0, %s139
      %s140 = sphi 0, %s137
      %s141 = sphi 0, %s140
      %s157 = sphi 0, %s141
    $region4: #{tpu_custom_call.1} parent=1 // loop_header_branch
      %20 = sbr.rel (%p18) target = $region8
    $region5: #{tpu_custom_call.1} parent=1 // loop_body
      %s22 = ssub.s32 %s17, 1
      %s23 = ssub.s32 %s17, 2
      %s24 = sadd.s32 %s17, 1
      %s25 = ssub.s32 %s17, %s24
      %p26 = scmp.eq.s32.totalorder %s25, 0
      %s28 = sadd.s32 %s27, 1
      %s29 = scalar_select %p26, %s27, %s28
      %p32 = pneg %p26
      %p33 = scmp.eq.s32.totalorder %s17, 1
      %p34 = por %p32, %p33
      %p35 = scmp.ne.s32.totalorder %s27, %s30
      %p36 = scmp.eq.s32.totalorder %s17, 0
      %p37 = por %p35, %p36
      %p38 = scmp.ne.s32.totalorder %s27, %s30
      %p39 = scmp.eq.s32.totalorder %s22, 1
      %p40 = por %p38, %p39
      %p41 = scmp.ne.s32.totalorder %s30, %s31
      %p42 = scmp.eq.s32.totalorder %s22, 0
      %p43 = por %p41, %p42
      %p44 = scmp.ne.s32.totalorder %s30, %s31
      %p45 = scmp.eq.s32.totalorder %s23, 1
      %p46 = por %p44, %p45
      %p48 = scmp.ne.s32.totalorder %s31, %s47
      %p49 = scmp.eq.s32.totalorder %s23, 0
      %p50 = por %p48, %p49
      %s52 = sadd.s32 %s51, 1
      %p55 = scmp.eq.s32.totalorder %s17, 1
      %p56 = scmp.ne.s32.totalorder %s51, %s53
      %p57 = scmp.eq.s32.totalorder %s17, 0
      %p58 = por %p56, %p57
      %p59 = scmp.ne.s32.totalorder %s51, %s53
      %p60 = scmp.eq.s32.totalorder %s22, 1
      %p61 = por %p59, %p60
      %p62 = scmp.ne.s32.totalorder %s53, %s54
      %p63 = scmp.eq.s32.totalorder %s22, 0
      %p64 = por %p62, %p63
      %p65 = scmp.ne.s32.totalorder %s53, %s54
      %p66 = scmp.eq.s32.totalorder %s23, 1
      %p67 = por %p65, %p66
      %p69 = scmp.ne.s32.totalorder %s54, %s68
      %p70 = scmp.eq.s32.totalorder %s23, 0
      %p71 = por %p69, %p70
      %s73 = sadd.s32 %s72, 1
      %p76 = scmp.eq.s32.totalorder %s17, 1
      %p77 = scmp.ne.s32.totalorder %s72, %s74
      %p78 = scmp.eq.s32.totalorder %s17, 0
      %p79 = por %p77, %p78
      %p80 = scmp.ne.s32.totalorder %s72, %s74
      %p81 = scmp.eq.s32.totalorder %s22, 1
      %p82 = por %p80, %p81
      %p83 = scmp.ne.s32.totalorder %s74, %s75
      %p84 = scmp.eq.s32.totalorder %s22, 0
      %p85 = por %p83, %p84
      %p86 = scmp.ne.s32.totalorder %s74, %s75
      %p87 = scmp.eq.s32.totalorder %s23, 1
      %p88 = por %p86, %p87
      %p90 = scmp.ne.s32.totalorder %s75, %s89
      %p91 = scmp.eq.s32.totalorder %s23, 0
      %p92 = por %p90, %p91
      %s94 = sadd.s32 %s93, 1
      %p97 = scmp.eq.s32.totalorder %s17, 1
      %p98 = scmp.ne.s32.totalorder %s93, %s95
      %p99 = scmp.eq.s32.totalorder %s17, 0
      %p100 = por %p98, %p99
      %p101 = scmp.ne.s32.totalorder %s93, %s95
      %p102 = scmp.eq.s32.totalorder %s22, 1
      %p103 = por %p101, %p102
      %p104 = scmp.ne.s32.totalorder %s95, %s96
      %p105 = scmp.eq.s32.totalorder %s22, 0
      %p106 = por %p104, %p105
      %p107 = scmp.ne.s32.totalorder %s95, %s96
      %p108 = scmp.eq.s32.totalorder %s23, 1
      %p109 = por %p107, %p108
      %p111 = scmp.ne.s32.totalorder %s96, %s110
      %p112 = scmp.eq.s32.totalorder %s23, 0
      %p113 = por %p111, %p112
      %s115 = sadd.s32 %s114, 1
      %p118 = scmp.eq.s32.totalorder %s17, 1
      %p119 = scmp.ne.s32.totalorder %s114, %s116
      %p120 = scmp.eq.s32.totalorder %s17, 0
      %p121 = por %p119, %p120
      %p122 = scmp.ne.s32.totalorder %s114, %s116
      %p123 = scmp.eq.s32.totalorder %s22, 1
      %p124 = por %p122, %p123
      %p125 = scmp.ne.s32.totalorder %s116, %s117
      %p126 = scmp.eq.s32.totalorder %s22, 0
      %p127 = por %p125, %p126
      %p128 = scmp.ne.s32.totalorder %s116, %s117
      %p129 = scmp.eq.s32.totalorder %s23, 1
      %p130 = por %p128, %p129
      %p132 = scmp.ne.s32.totalorder %s117, %s131
      %p133 = scmp.eq.s32.totalorder %s23, 0
      %p134 = por %p132, %p133
      %s135 = ssub.s32 %s17, %s24
      %p136 = scmp.eq.s32.totalorder %s135, 0
      %s138 = sadd.s32 %s137, 1
      %s139 = scalar_select %p136, %s137, %s138
      %p142 = pneg %p136
      %p143 = scmp.eq.s32.totalorder %s17, 1
      %p144 = por %p142, %p143
      %p145 = scmp.ne.s32.totalorder %s137, %s140
      %p146 = scmp.eq.s32.totalorder %s17, 0
      %p147 = por %p145, %p146
      %p148 = scmp.ne.s32.totalorder %s137, %s140
      %p149 = scmp.eq.s32.totalorder %s22, 1
      %p150 = por %p148, %p149
      %p151 = scmp.ne.s32.totalorder %s140, %s141
      %p152 = scmp.eq.s32.totalorder %s22, 0
      %p153 = por %p151, %p152
      %p154 = scmp.ne.s32.totalorder %s140, %s141
      %p155 = scmp.eq.s32.totalorder %s23, 1
      %p156 = por %p154, %p155
      %p158 = scmp.ne.s32.totalorder %s141, %s157
      %p159 = scmp.eq.s32.totalorder %s23, 0
      %p160 = por %p158, %p159
      %p161 = scmp.le.s32.totalorder 1, %s17
      %p162 = scmp.lt.s32.totalorder %s17, 3
      %p163 = pnand %p161, %p162
      %p164 = pneg %p163
      // Predicated region
      $region9: #{tpu_custom_call.1} parent=5 // pred_check
        _
      $region10: #{tpu_custom_call.1} parent=5 // pred_check_branch
        %166 = sbr.rel (%p163) target = $region12
      $region11: #{tpu_custom_call.1} parent=5 // pred_region
        %s167 = ssub.s32 %s17, 1
        // Predicated region
        $region13: #{tpu_custom_call.1} parent=11 // pred_check
          %p168 = pneg %p64
        $region14: #{tpu_custom_call.1} parent=11 // pred_check_branch
          %170 = sbr.rel (%p168) target = $region16
        $region15: #{tpu_custom_call.1} parent=11 // pred_region
          _
        $region16: #{tpu_custom_call.1} parent=11 // pred_fallthru
          _
        // Predicated region
        $region17: #{tpu_custom_call.1} parent=11 // pred_check
          %p171 = pneg %p85
        $region18: #{tpu_custom_call.1} parent=11 // pred_check_branch
          %173 = sbr.rel (%p171) target = $region20
        $region19: #{tpu_custom_call.1} parent=11 // pred_region
          _
        $region20: #{tpu_custom_call.1} parent=11 // pred_fallthru
          _
        // Predicated region
        $region21: #{tpu_custom_call.1} parent=11 // pred_check
          %p174 = pneg %p106
        $region22: #{tpu_custom_call.1} parent=11 // pred_check_branch
          %176 = sbr.rel (%p174) target = $region24
        $region23: #{tpu_custom_call.1} parent=11 // pred_region
          _
        $region24: #{tpu_custom_call.1} parent=11 // pred_fallthru
          _
        // Predicated region
        $region25: #{tpu_custom_call.1} parent=11 // pred_check
          %p177 = pneg %p127
        $region26: #{tpu_custom_call.1} parent=11 // pred_check_branch
          %179 = sbr.rel (%p177) target = $region28
        $region27: #{tpu_custom_call.1} parent=11 // pred_region
          _
        $region28: #{tpu_custom_call.1} parent=11 // pred_fallthru
          _
      $region12: #{tpu_custom_call.1} parent=5 // pred_fallthru
        _
      %p180 = scmp.lt.s32.totalorder %s17, 2
      // Predicated region
      $region29: #{tpu_custom_call.1} parent=5 // pred_check
        %p181 = pneg %p180
      $region30: #{tpu_custom_call.1} parent=5 // pred_check_branch
        %183 = sbr.rel (%p181) target = $region32
      $region31: #{tpu_custom_call.1} parent=5 // pred_region
        // Predicated region
        $region33: #{tpu_custom_call.1} parent=31 // pred_check
          %p184 = pneg %p37
        $region34: #{tpu_custom_call.1} parent=31 // pred_check_branch
          %186 = sbr.rel (%p184) target = $region36
        $region35: #{tpu_custom_call.1} parent=31 // pred_region
          %s187 = sand.u32 %s27, 1
          %s188 = scalar_lea.sflag [#allocation3], %s187
          %s189 = sand.u32 %s27, 1
          %s190 = smul.addr %s189, 8
          %s191 = scalar_lea.vmem [#allocation2], %s190
          %s193 = ssub.s32 128, 128
          %194 = vsyncadd %s188, %s193
          %s195 = smul.addr %s17, 2
          %s196 = smul.addr %s195, 64
          %s197 = scalar_lea.hbm %s0, %s196
          %s199 = sshll.u32 %s191, 4
          %s200 = int_to_ptr.vmem [resolvable:$true] %s199
          %202 = dma.hbm_to_vmem [thread:$0]  %s197, 128, %s200, %s188
        $region36: #{tpu_custom_call.1} parent=31 // pred_fallthru
          _
      $region32: #{tpu_custom_call.1} parent=5 // pred_fallthru
        _
      %p203 = scmp.le.s32.totalorder 1, %s17
      %p204 = scmp.lt.s32.totalorder %s17, 3
      %p205 = pnand %p203, %p204
      %p206 = pneg %p205
      // Predicated region
      $region37: #{tpu_custom_call.1} parent=5 // pred_check
        _
      $region38: #{tpu_custom_call.1} parent=5 // pred_check_branch
        %208 = sbr.rel (%p205) target = $region40
      $region39: #{tpu_custom_call.1} parent=5 // pred_region
        %s209 = ssub.s32 %s17, 1
        %s210 = sand.u32 %s30, 1
        %s211 = scalar_lea.sflag [#allocation3], %s210
        %s212 = sand.u32 %s30, 1
        %s213 = smul.addr %s212, 8
        %s214 = scalar_lea.vmem [#allocation2], %s213
        // Predicated region
        $region41: #{tpu_custom_call.1} parent=39 // pred_check
          %p215 = pneg %p43
        $region42: #{tpu_custom_call.1} parent=39 // pred_check_branch
          %217 = sbr.rel (%p215) target = $region44
        $region43: #{tpu_custom_call.1} parent=39 // pred_region
          %218 = dma.done %s211, 128
        $region44: #{tpu_custom_call.1} parent=39 // pred_fallthru
          _
        %s219 = sand.u32 %s30, 1
        %s220 = scalar_lea.sflag [#allocation3], %s219
        %s221 = sand.u32 %s30, 1
        %s222 = smul.addr %s221, 8
        %s223 = scalar_lea.vmem [#allocation2], %s222
        %p224 = pneg %p43
        %p225 = pneg %p40
        %p226 = pneg %p64
        %p227 = pneg %p61
        %p228 = pneg %p85
        %p229 = pneg %p82
        %p230 = pneg %p106
        %p231 = pneg %p103
        %p232 = pneg %p127
        %p233 = pneg %p124
        %p234 = pneg %p153
        %p235 = pneg %p150
        %s236 = sand.u32 %s140, 1
        %s237 = scalar_lea.sflag [#allocation4], %s236
        %s238 = sand.u32 %s140, 1
        %s239 = smul.addr %s238, 8
        %s240 = scalar_lea.vmem [#allocation5], %s239
        %v241 = vld [vmem:[%s214] sm:$0xff]
        %v243 = vcombine.high %v241, %v241
        %vm245 = vcmask 1043456
        %v246 = vsel %vm245, %v241, 0.0
        %v247 = vsel %vm245, %v243, 0.0
        %v248 = vadd.f32 %v246, %v247
        %249 = vadd.xlane.f32.xlu0 %v248
        %v250 = vpop.xlane.xlu0 %249
        %v251 = vrcp.pop 256.0
        %v252 = vmul.f32 %v250, %v251
        %v253 = vld [vmem:[%s1] sm:$0xf]
        %v254 = vld [vmem:[%s2] sm:$0xf]
        %vm255 = vcmask 31744
        %v257 = vsel %vm255, %v253, 0
        %v260 = vsel %vm245, %v252, 0
        %262 = vmatprep.subr.mxu0 0.0
        %263 = vmatpush1.msra.mxu0 0.0
        %264 = vmatprep.subr.mxu0 0.0
        %265 = vmatpush1.msra.mxu0 0.0
        %266 = vmatprep.subr.mxu0 0.0
        %267 = vmatpush1.msra.mxu0 0.0
        %268 = vmatprep.subr.mxu0 0.0
        %269 = vmatpush1.msra.mxu0 0.0
        %270 = vmatprep.subr.mxu0 0.0
        %271 = vmatpush1.msra.mxu0 0.0
        %272 = vmatprep.subr.mxu0 0.0
        %273 = vmatpush1.msra.mxu0 0.0
        %274 = vmatprep.subr.mxu0 0.0
        %275 = vmatpush1.msra.mxu0 0.0
        %276 = vmatprep.subr.mxu0 0.0
        %277 = vmatpush1.msra.mxu0 0.0
        %278 = vmatprep.subr.mxu0 0.0
        %279 = vmatpush1.msra.mxu0 0.0
        %280 = vmatprep.subr.mxu0 0.0
        %281 = vmatpush1.msra.mxu0 0.0
        %282 = vmatprep.subr.mxu0 0.0
        %283 = vmatpush1.msra.mxu0 0.0
        %284 = vmatprep.subr.mxu0 0.0
        %285 = vmatpush1.msra.mxu0 0.0
        %286 = vmatprep.subr.mxu0 0.0
        %287 = vmatpush1.msra.mxu0 0.0
        %288 = vmatprep.subr.mxu0 0.0
        %289 = vmatpush1.msra.mxu0 0.0
        %290 = vmatprep.subr.mxu0 0.0
        %291 = vmatpush1.msra.mxu0 0.0
        %292 = vmatprep.subr.mxu0 0.0
        %293 = vmatpush1.msra.mxu0 %v260
        %294 = vmatprep.subr.mxu0 0.0
        %295 = vmatpush2.msra.mxu0 0.0
        %296 = vmatprep.subr.mxu0 0.0
        %297 = vmatpush2.msra.mxu0 0.0
        %298 = vmatprep.subr.mxu0 0.0
        %299 = vmatpush2.msra.mxu0 0.0
        %300 = vmatprep.subr.mxu0 0.0
        %301 = vmatpush2.msra.mxu0 0.0
        %302 = vmatprep.subr.mxu0 0.0
        %303 = vmatpush2.msra.mxu0 0.0
        %304 = vmatprep.subr.mxu0 0.0
        %305 = vmatpush2.msra.mxu0 0.0
        %306 = vmatprep.subr.mxu0 0.0
        %307 = vmatpush2.msra.mxu0 0.0
        %308 = vmatprep.subr.mxu0 0.0
        %309 = vmatpush2.msra.mxu0 0.0
        %310 = vmatprep.subr.mxu0 0.0
        %311 = vmatpush2.msra.mxu0 0.0
        %312 = vmatprep.subr.mxu0 0.0
        %313 = vmatpush2.msra.mxu0 0.0
        %314 = vmatprep.subr.mxu0 0.0
        %315 = vmatpush2.msra.mxu0 0.0
        %316 = vmatprep.subr.mxu0 0.0
        %317 = vmatpush2.msra.mxu0 0.0
        %318 = vmatprep.subr.mxu0 0.0
        %319 = vmatpush2.msra.mxu0 0.0
        %320 = vmatprep.subr.mxu0 0.0
        %321 = vmatpush2.msra.mxu0 0.0
        %322 = vmatprep.subr.mxu0 0.0
        %323 = vmatpush2.msra.mxu0 0.0
        %324 = vmatprep.subr.mxu0 0.0
        %325 = vmatpush2.msra.mxu0 0.0
        %326 = vmatprep.mubr.f32.mxu0 0.0
        %327 = vmatmul.mubr.f32.gmra.mxu0 %v257
        %v328 = vpop.f32.mrf.mxu0
        %v329 = vadd.f32 %v254, %v328
        %v330 = vpop.f32.mrf.mxu0
        %331 = vdwg.mxu0
        %v332 = vxor.u32 %v329, 2147483648
        %v333 = vmul.f32 %v332, 1.442695
        %v334 = vpow.pop %v333
        %v335 = vadd.f32 %v334, 1.0
        %v336 = vrcp.pop %v335
        %v337 = vmul.f32 1.0, %v336
        %339 = vset.pattern.permute.xlu0 0
        %340 = vperm.xlu0 %339, %v337
        %v341 = vpop.permute.xlu0 %340
        %v343 = vunpack.c.l.s4 839922192
        %v344 = vunpack.c.0.s8 %v343
        %v345 = vlaneseq
        %v346 = vshrl.u32 %v345, 7
        %v347 = vsub.s32 %v344, %v346
        %v348 = vrot.slane %v341, %v347
        %v350 = vmul.f32 %v241, %v348
        %v352 = vcombine.high %v350, %v350
        %v354 = vsel %vm245, %v350, 0.0
        %v355 = vrot.slane %v354, 4
        %v356 = vadd.f32 %v354, %v355
        %v357 = vrot.slane %v356, 2
        %v358 = vadd.f32 %v356, %v357
        %v359 = vrot.slane %v358, 1
        %v360 = vadd.f32 %v358, %v359
        %v361 = vsel %vm245, %v352, 0.0
        %v362 = vrot.slane %v361, 4
        %v363 = vadd.f32 %v361, %v362
        %v364 = vrot.slane %v363, 2
        %v365 = vadd.f32 %v363, %v364
        %v366 = vrot.slane %v365, 1
        %v367 = vadd.f32 %v365, %v366
        %v368 = vrcp.pop 4.0
        %v369 = vmul.f32 %v360, %v368
        %v370 = vmul.f32 %v367, %v368
        %v371 = vsel %vm245, %v350, -inf
        %v372 = vrot.slane %v371, 4
        %v373 = vmax.f32 %v371, %v372
        %v374 = vrot.slane %v373, 2
        %v375 = vmax.f32 %v373, %v374
        %v376 = vrot.slane %v375, 1
        %v377 = vmax.f32 %v375, %v376
        %v378 = vsel %vm245, %v352, -inf
        %v379 = vrot.slane %v378, 4
        %v380 = vmax.f32 %v378, %v379
        %v381 = vrot.slane %v380, 2
        %v382 = vmax.f32 %v380, %v381
        %v383 = vrot.slane %v382, 1
        %v384 = vmax.f32 %v382, %v383
        %vm385 = vcmask 1040384
        %v386 = vsel %vm385, %v369, %v377
        %v387 = vsel %vm385, %v370, %v384
        %388 = vrot.lane.b32.xlu0 %v386, 48
        %v389 = vpop.permute.xlu0 %388
        %390 = vrot.lane.b32.xlu0 %v387, 48
        %v391 = vpop.permute.xlu0 %390
        %v392 = vlaneseq
        %v393 = vand.u32 %v392, 127
        %vm394 = vcmp.lt.s32.totalorder %v393, 48
        %v395 = vsel %vm394, %v389, %v391
        %v396 = vsel %vm394, %v391, %v389
        %v397 = vld [vmem:[%s4] ss:$8 sm:$0x3]
        %v399 = vlaneseq
        %v400 = vshrl.u32 %v399, 7
        %v401 = vsub.s32 0, %v400
        %v402 = vrot.slane %v397, %v401
        %v403 = vlaneseq
        %v404 = vshrl.u32 %v403, 7
        %v405 = vsub.s32 1, %v404
        %v406 = vrot.slane %v397, %v405
        %v409 = vmul.f32 %v396, %v402
        %v410 = vmul.f32 %v395, %v406
        %411 = vrot.lane.b32.xlu0 %v386, 32
        %v412 = vpop.permute.xlu0 %411
        %413 = vrot.lane.b32.xlu0 %v387, 32
        %v414 = vpop.permute.xlu0 %413
        %vm415 = vcmp.lt.s32.totalorder %v393, 32
        %v416 = vsel %vm415, %v412, %v414
        %v417 = vsel %vm415, %v414, %v412
        %s418 = scalar_lea.vmem %s4, 1
        %v419 = vld [vmem:[%s418] ss:$8 sm:$0x3]
        %v421 = vlaneseq
        %v422 = vshrl.u32 %v421, 7
        %v423 = vsub.s32 0, %v422
        %v424 = vrot.slane %v419, %v423
        %v425 = vlaneseq
        %v426 = vshrl.u32 %v425, 7
        %v427 = vsub.s32 1, %v426
        %v428 = vrot.slane %v419, %v427
        %v431 = vmul.f32 %v417, %v424
        %v432 = vmul.f32 %v416, %v428
        %433 = vrot.lane.b32.xlu0 %v386, 16
        %v434 = vpop.permute.xlu0 %433
        %435 = vrot.lane.b32.xlu0 %v387, 16
        %v436 = vpop.permute.xlu0 %435
        %vm437 = vcmp.lt.s32.totalorder %v393, 16
        %v438 = vsel %vm437, %v434, %v436
        %v439 = vsel %vm437, %v436, %v434
        %s440 = scalar_lea.vmem %s4, 2
        %v441 = vld [vmem:[%s440] ss:$8 sm:$0x3]
        %v443 = vlaneseq
        %v444 = vshrl.u32 %v443, 7
        %v445 = vsub.s32 0, %v444
        %v446 = vrot.slane %v441, %v445
        %v447 = vlaneseq
        %v448 = vshrl.u32 %v447, 7
        %v449 = vsub.s32 1, %v448
        %v450 = vrot.slane %v441, %v449
        %v453 = vmul.f32 %v439, %v446
        %v454 = vmul.f32 %v438, %v450
        %s455 = scalar_lea.vmem %s4, 3
        %v456 = vld [vmem:[%s455] ss:$8 sm:$0x3]
        %v458 = vlaneseq
        %v459 = vshrl.u32 %v458, 7
        %v460 = vsub.s32 0, %v459
        %v461 = vrot.slane %v456, %v460
        %v462 = vlaneseq
        %v463 = vshrl.u32 %v462, 7
        %v464 = vsub.s32 1, %v463
        %v465 = vrot.slane %v456, %v464
        %v468 = vmul.f32 %v386, %v461
        %v469 = vmul.f32 %v387, %v465
        %470 = vrot.lane.b32.xlu0 %v386, 112
        %v471 = vpop.permute.xlu0 %470
        %472 = vrot.lane.b32.xlu0 %v387, 112
        %v473 = vpop.permute.xlu0 %472
        %vm474 = vcmp.lt.s32.totalorder %v393, 112
        %v475 = vsel %vm474, %v471, %v473
        %v476 = vsel %vm474, %v473, %v471
        %s477 = scalar_lea.vmem %s4, 4
        %v478 = vld [vmem:[%s477] ss:$8 sm:$0x3]
        %v480 = vlaneseq
        %v481 = vshrl.u32 %v480, 7
        %v482 = vsub.s32 0, %v481
        %v483 = vrot.slane %v478, %v482
        %v484 = vlaneseq
        %v485 = vshrl.u32 %v484, 7
        %v486 = vsub.s32 1, %v485
        %v487 = vrot.slane %v478, %v486
        %v490 = vmul.f32 %v475, %v483
        %v491 = vmul.f32 %v476, %v487
        %492 = vrot.lane.b32.xlu0 %v386, 96
        %v493 = vpop.permute.xlu0 %492
        %494 = vrot.lane.b32.xlu0 %v387, 96
        %v495 = vpop.permute.xlu0 %494
        %vm496 = vcmp.lt.s32.totalorder %v393, 96
        %v497 = vsel %vm496, %v493, %v495
        %v498 = vsel %vm496, %v495, %v493
        %s499 = scalar_lea.vmem %s4, 5
        %v500 = vld [vmem:[%s499] ss:$8 sm:$0x3]
        %v502 = vlaneseq
        %v503 = vshrl.u32 %v502, 7
        %v504 = vsub.s32 0, %v503
        %v505 = vrot.slane %v500, %v504
        %v506 = vlaneseq
        %v507 = vshrl.u32 %v506, 7
        %v508 = vsub.s32 1, %v507
        %v509 = vrot.slane %v500, %v508
        %v512 = vmul.f32 %v497, %v505
        %v513 = vmul.f32 %v498, %v509
        %514 = vrot.lane.b32.xlu0 %v386, 80
        %v515 = vpop.permute.xlu0 %514
        %516 = vrot.lane.b32.xlu0 %v387, 80
        %v517 = vpop.permute.xlu0 %516
        %vm518 = vcmp.lt.s32.totalorder %v393, 80
        %v519 = vsel %vm518, %v515, %v517
        %v520 = vsel %vm518, %v517, %v515
        %s521 = scalar_lea.vmem %s4, 6
        %v522 = vld [vmem:[%s521] ss:$8 sm:$0x3]
        %v524 = vlaneseq
        %v525 = vshrl.u32 %v524, 7
        %v526 = vsub.s32 0, %v525
        %v527 = vrot.slane %v522, %v526
        %v528 = vlaneseq
        %v529 = vshrl.u32 %v528, 7
        %v530 = vsub.s32 1, %v529
        %v531 = vrot.slane %v522, %v530
        %v534 = vmul.f32 %v519, %v527
        %v535 = vmul.f32 %v520, %v531
        %v538 = vrot.slane %v431, 6
        %v539 = vrot.slane %v432, 6
        %v544 = vrot.slane %v453, 4
        %v545 = vrot.slane %v454, 4
        %v550 = vrot.slane %v468, 2
        %v551 = vrot.slane %v469, 2
        %v556 = vrot.slane %v512, 6
        %v557 = vrot.slane %v513, 6
        %v562 = vrot.slane %v534, 4
        %v563 = vrot.slane %v535, 4
        %vm566 = vcmask 1041408
        %v567 = vsel %vm566, %v409, %v538
        %v568 = vsel %vm566, %v410, %v539
        %v569 = vsel %vm245, %v567, %v544
        %v570 = vsel %vm245, %v568, %v545
        %vm571 = vcmask 1045504
        %v572 = vsel %vm571, %v569, %v550
        %v573 = vsel %vm571, %v570, %v551
        %v574 = vsel %vm566, %v490, %v556
        %v575 = vsel %vm566, %v491, %v557
        %v576 = vsel %vm245, %v574, %v562
        %v577 = vsel %vm245, %v575, %v563
        %578 = vrot.lane.b32.xlu0 %v572, 3
        %v579 = vpop.permute.xlu0 %578
        %580 = vrot.lane.b32.xlu0 %v576, 3
        %v581 = vpop.permute.xlu0 %580
        %582 = vrot.lane.b32.xlu0 %v573, 3
        %v583 = vpop.permute.xlu0 %582
        %584 = vrot.lane.b32.xlu0 %v577, 3
        %v585 = vpop.permute.xlu0 %584
        %vm586 = vcmp.lt.s32.totalorder %v393, 3
        %v587 = vsel %vm586, %v579, %v583
        %v588 = vsel %vm586, %v581, %v585
        %v589 = vsel %vm586, %v583, %v579
        %v590 = vsel %vm586, %v585, %v581
        %v591 = vld [vmem:[%s3] sm:$0xff]
        %v592 = vld [vmem:[%s3 + $0x8] sm:$0x3f]
        %594 = vset.pattern.permute.xlu0 0
        %595 = vperm.xlu0 %594, %v591
        %v596 = vpop.permute.xlu0 %595
        %599 = vset.pattern.permute.xlu0 0
        %600 = vperm.xlu0 %599, %v592
        %v601 = vpop.permute.xlu0 %600
        %v603 = vmul.f32 %v589, %v596
        %v604 = vmul.f32 %v587, %v596
        %v605 = vmul.f32 %v590, %v601
        %v606 = vmul.f32 %v588, %v601
        %v607 = vsel %vm571, %v605, 0.0
        %v608 = vadd.f32 %v603, %v607
        %v609 = vrot.slane %v608, 4
        %v610 = vadd.f32 %v608, %v609
        %v611 = vrot.slane %v610, 2
        %v612 = vadd.f32 %v610, %v611
        %v613 = vrot.slane %v612, 1
        %v614 = vadd.f32 %v612, %v613
        %v615 = vsel %vm571, %v606, 0.0
        %v616 = vadd.f32 %v604, %v615
        %v617 = vrot.slane %v616, 4
        %v618 = vadd.f32 %v616, %v617
        %v619 = vrot.slane %v618, 2
        %v620 = vadd.f32 %v618, %v619
        %v621 = vrot.slane %v620, 1
        %v622 = vadd.f32 %v620, %v621
        %s623 = scalar_lea.vmem %s4, 7
        %v624 = vld [vmem:[%s623] ss:$8 sm:$0x3]
        %v627 = vcombine.low %v614, %v622
        %v629 = vunpack.c.l.s4 1966171168
        %v630 = vunpack.c.0.s8 %v629
        %v631 = vlaneseq
        %v632 = vshrl.u32 %v631, 7
        %v633 = vsub.s32 %v630, %v632
        %v634 = vrot.slane %v627, %v633
        %v636 = vunpack.c.l.s4 1966171168
        %v637 = vunpack.c.0.s8 %v636
        %v638 = vlaneseq
        %v639 = vshrl.u32 %v638, 7
        %v640 = vsub.s32 %v637, %v639
        %v641 = vrot.slane %v634, %v640
        %v643 = vmul.f32 %v624, %v641
        %v644 = vadd.f32 %v643, 0.0
        %645 = vrot.lane.b32.xlu0 %v572, 2
        %v646 = vpop.permute.xlu0 %645
        %647 = vrot.lane.b32.xlu0 %v576, 2
        %v648 = vpop.permute.xlu0 %647
        %649 = vrot.lane.b32.xlu0 %v573, 2
        %v650 = vpop.permute.xlu0 %649
        %651 = vrot.lane.b32.xlu0 %v577, 2
        %v652 = vpop.permute.xlu0 %651
        %vm653 = vcmp.lt.s32.totalorder %v393, 2
        %v654 = vsel %vm653, %v646, %v650
        %v655 = vsel %vm653, %v648, %v652
        %v656 = vsel %vm653, %v650, %v646
        %v657 = vsel %vm653, %v652, %v648
        %v658 = vld [vmem:[%s3] sm:$0xff]
        %v659 = vld [vmem:[%s3 + $0x8] sm:$0x3f]
        %661 = vset.pattern.permute.xlu0 1
        %662 = vperm.xlu0 %661, %v658
        %v663 = vpop.permute.xlu0 %662
        %666 = vset.pattern.permute.xlu0 1
        %667 = vperm.xlu0 %666, %v659
        %v668 = vpop.permute.xlu0 %667
        %v670 = vmul.f32 %v656, %v663
        %v671 = vmul.f32 %v654, %v663
        %v672 = vmul.f32 %v657, %v668
        %v673 = vmul.f32 %v655, %v668
        %v674 = vsel %vm571, %v672, 0.0
        %v675 = vadd.f32 %v670, %v674
        %v676 = vrot.slane %v675, 4
        %v677 = vadd.f32 %v675, %v676
        %v678 = vrot.slane %v677, 2
        %v679 = vadd.f32 %v677, %v678
        %v680 = vrot.slane %v679, 1
        %v681 = vadd.f32 %v679, %v680
        %v682 = vsel %vm571, %v673, 0.0
        %v683 = vadd.f32 %v671, %v682
        %v684 = vrot.slane %v683, 4
        %v685 = vadd.f32 %v683, %v684
        %v686 = vrot.slane %v685, 2
        %v687 = vadd.f32 %v685, %v686
        %v688 = vrot.slane %v687, 1
        %v689 = vadd.f32 %v687, %v688
        %s690 = scalar_lea.vmem %s4, 16
        %v691 = vld [vmem:[%s690] ss:$8 sm:$0x3]
        %v694 = vcombine.low %v681, %v689
        %v696 = vunpack.c.l.s4 1966171168
        %v697 = vunpack.c.0.s8 %v696
        %v698 = vlaneseq
        %v699 = vshrl.u32 %v698, 7
        %v700 = vsub.s32 %v697, %v699
        %v701 = vrot.slane %v694, %v700
        %v703 = vunpack.c.l.s4 1966171168
        %v704 = vunpack.c.0.s8 %v703
        %v705 = vlaneseq
        %v706 = vshrl.u32 %v705, 7
        %v707 = vsub.s32 %v704, %v706
        %v708 = vrot.slane %v701, %v707
        %v710 = vmul.f32 %v691, %v708
        %v711 = vadd.f32 %v644, %v710
        %712 = vrot.lane.b32.xlu0 %v572, 1
        %v713 = vpop.permute.xlu0 %712
        %714 = vrot.lane.b32.xlu0 %v576, 1
        %v715 = vpop.permute.xlu0 %714
        %716 = vrot.lane.b32.xlu0 %v573, 1
        %v717 = vpop.permute.xlu0 %716
        %718 = vrot.lane.b32.xlu0 %v577, 1
        %v719 = vpop.permute.xlu0 %718
        %vm720 = vcmp.lt.s32.totalorder %v393, 1
        %v721 = vsel %vm720, %v713, %v717
        %v722 = vsel %vm720, %v715, %v719
        %v723 = vsel %vm720, %v717, %v713
        %v724 = vsel %vm720, %v719, %v715
        %v725 = vld [vmem:[%s3] sm:$0xff]
        %v726 = vld [vmem:[%s3 + $0x8] sm:$0x3f]
        %728 = vset.pattern.permute.xlu0 2
        %729 = vperm.xlu0 %728, %v725
        %v730 = vpop.permute.xlu0 %729
        %733 = vset.pattern.permute.xlu0 2
        %734 = vperm.xlu0 %733, %v726
        %v735 = vpop.permute.xlu0 %734
        %v737 = vmul.f32 %v723, %v730
        %v738 = vmul.f32 %v721, %v730
        %v739 = vmul.f32 %v724, %v735
        %v740 = vmul.f32 %v722, %v735
        %v741 = vsel %vm571, %v739, 0.0
        %v742 = vadd.f32 %v737, %v741
        %v743 = vrot.slane %v742, 4
        %v744 = vadd.f32 %v742, %v743
        %v745 = vrot.slane %v744, 2
        %v746 = vadd.f32 %v744, %v745
        %v747 = vrot.slane %v746, 1
        %v748 = vadd.f32 %v746, %v747
        %v749 = vsel %vm571, %v740, 0.0
        %v750 = vadd.f32 %v738, %v749
        %v751 = vrot.slane %v750, 4
        %v752 = vadd.f32 %v750, %v751
        %v753 = vrot.slane %v752, 2
        %v754 = vadd.f32 %v752, %v753
        %v755 = vrot.slane %v754, 1
        %v756 = vadd.f32 %v754, %v755
        %s757 = scalar_lea.vmem %s4, 17
        %v758 = vld [vmem:[%s757] ss:$8 sm:$0x3]
        %v761 = vcombine.low %v748, %v756
        %v763 = vunpack.c.l.s4 1966171168
        %v764 = vunpack.c.0.s8 %v763
        %v765 = vlaneseq
        %v766 = vshrl.u32 %v765, 7
        %v767 = vsub.s32 %v764, %v766
        %v768 = vrot.slane %v761, %v767
        %v770 = vunpack.c.l.s4 1966171168
        %v771 = vunpack.c.0.s8 %v770
        %v772 = vlaneseq
        %v773 = vshrl.u32 %v772, 7
        %v774 = vsub.s32 %v771, %v773
        %v775 = vrot.slane %v768, %v774
        %v777 = vmul.f32 %v758, %v775
        %v778 = vadd.f32 %v711, %v777
        %v779 = vld [vmem:[%s3] sm:$0xff]
        %v780 = vld [vmem:[%s3 + $0x8] sm:$0x3f]
        %782 = vset.pattern.permute.xlu0 3
        %783 = vperm.xlu0 %782, %v779
        %v784 = vpop.permute.xlu0 %783
        %787 = vset.pattern.permute.xlu0 3
        %788 = vperm.xlu0 %787, %v780
        %v789 = vpop.permute.xlu0 %788
        %v791 = vmul.f32 %v572, %v784
        %v792 = vmul.f32 %v573, %v784
        %v793 = vmul.f32 %v576, %v789
        %v794 = vmul.f32 %v577, %v789
        %v795 = vsel %vm571, %v793, 0.0
        %v796 = vadd.f32 %v791, %v795
        %v797 = vrot.slane %v796, 4
        %v798 = vadd.f32 %v796, %v797
        %v799 = vrot.slane %v798, 2
        %v800 = vadd.f32 %v798, %v799
        %v801 = vrot.slane %v800, 1
        %v802 = vadd.f32 %v800, %v801
        %v803 = vsel %vm571, %v794, 0.0
        %v804 = vadd.f32 %v792, %v803
        %v805 = vrot.slane %v804, 4
        %v806 = vadd.f32 %v804, %v805
        %v807 = vrot.slane %v806, 2
        %v808 = vadd.f32 %v806, %v807
        %v809 = vrot.slane %v808, 1
        %v810 = vadd.f32 %v808, %v809
        %s811 = scalar_lea.vmem %s4, 18
        %v812 = vld [vmem:[%s811] ss:$8 sm:$0x3]
        %v815 = vcombine.low %v802, %v810
        %v817 = vunpack.c.l.s4 1966171168
        %v818 = vunpack.c.0.s8 %v817
        %v819 = vlaneseq
        %v820 = vshrl.u32 %v819, 7
        %v821 = vsub.s32 %v818, %v820
        %v822 = vrot.slane %v815, %v821
        %v824 = vunpack.c.l.s4 1966171168
        %v825 = vunpack.c.0.s8 %v824
        %v826 = vlaneseq
        %v827 = vshrl.u32 %v826, 7
        %v828 = vsub.s32 %v825, %v827
        %v829 = vrot.slane %v822, %v828
        %v831 = vmul.f32 %v812, %v829
        %v832 = vadd.f32 %v778, %v831
        %833 = vrot.lane.b32.xlu0 %v572, 127
        %v834 = vpop.permute.xlu0 %833
        %835 = vrot.lane.b32.xlu0 %v576, 127
        %v836 = vpop.permute.xlu0 %835
        %837 = vrot.lane.b32.xlu0 %v573, 127
        %v838 = vpop.permute.xlu0 %837
        %839 = vrot.lane.b32.xlu0 %v577, 127
        %v840 = vpop.permute.xlu0 %839
        %vm841 = vcmp.lt.s32.totalorder %v393, 127
        %v842 = vsel %vm841, %v834, %v838
        %v843 = vsel %vm841, %v836, %v840
        %v844 = vsel %vm841, %v838, %v834
        %v845 = vsel %vm841, %v840, %v836
        %v846 = vld [vmem:[%s3] sm:$0xff]
        %v847 = vld [vmem:[%s3 + $0x8] sm:$0x3f]
        %849 = vset.pattern.permute.xlu0 4
        %850 = vperm.xlu0 %849, %v846
        %v851 = vpop.permute.xlu0 %850
        %854 = vset.pattern.permute.xlu0 4
        %855 = vperm.xlu0 %854, %v847
        %v856 = vpop.permute.xlu0 %855
        %v858 = vmul.f32 %v842, %v851
        %v859 = vmul.f32 %v844, %v851
        %v860 = vmul.f32 %v843, %v856
        %v861 = vmul.f32 %v845, %v856
        %v862 = vsel %vm571, %v860, 0.0
        %v863 = vadd.f32 %v858, %v862
        %v864 = vrot.slane %v863, 4
        %v865 = vadd.f32 %v863, %v864
        %v866 = vrot.slane %v865, 2
        %v867 = vadd.f32 %v865, %v866
        %v868 = vrot.slane %v867, 1
        %v869 = vadd.f32 %v867, %v868
        %v870 = vsel %vm571, %v861, 0.0
        %v871 = vadd.f32 %v859, %v870
        %v872 = vrot.slane %v871, 4
        %v873 = vadd.f32 %v871, %v872
        %v874 = vrot.slane %v873, 2
        %v875 = vadd.f32 %v873, %v874
        %v876 = vrot.slane %v875, 1
        %v877 = vadd.f32 %v875, %v876
        %s878 = scalar_lea.vmem %s4, 19
        %v879 = vld [vmem:[%s878] ss:$8 sm:$0x3]
        %v882 = vcombine.low %v869, %v877
        %v884 = vunpack.c.l.s4 1966171168
        %v885 = vunpack.c.0.s8 %v884
        %v886 = vlaneseq
        %v887 = vshrl.u32 %v886, 7
        %v888 = vsub.s32 %v885, %v887
        %v889 = vrot.slane %v882, %v888
        %v891 = vunpack.c.l.s4 1966171168
        %v892 = vunpack.c.0.s8 %v891
        %v893 = vlaneseq
        %v894 = vshrl.u32 %v893, 7
        %v895 = vsub.s32 %v892, %v894
        %v896 = vrot.slane %v889, %v895
        %v898 = vmul.f32 %v879, %v896
        %v899 = vadd.f32 %v832, %v898
        %900 = vrot.lane.b32.xlu0 %v572, 126
        %v901 = vpop.permute.xlu0 %900
        %902 = vrot.lane.b32.xlu0 %v576, 126
        %v903 = vpop.permute.xlu0 %902
        %904 = vrot.lane.b32.xlu0 %v573, 126
        %v905 = vpop.permute.xlu0 %904
        %906 = vrot.lane.b32.xlu0 %v577, 126
        %v907 = vpop.permute.xlu0 %906
        %vm908 = vcmp.lt.s32.totalorder %v393, 126
        %v909 = vsel %vm908, %v901, %v905
        %v910 = vsel %vm908, %v903, %v907
        %v911 = vsel %vm908, %v905, %v901
        %v912 = vsel %vm908, %v907, %v903
        %v913 = vld [vmem:[%s3] sm:$0xff]
        %v914 = vld [vmem:[%s3 + $0x8] sm:$0x3f]
        %916 = vset.pattern.permute.xlu0 5
        %917 = vperm.xlu0 %916, %v913
        %v918 = vpop.permute.xlu0 %917
        %921 = vset.pattern.permute.xlu0 5
        %922 = vperm.xlu0 %921, %v914
        %v923 = vpop.permute.xlu0 %922
        %v925 = vmul.f32 %v909, %v918
        %v926 = vmul.f32 %v911, %v918
        %v927 = vmul.f32 %v910, %v923
        %v928 = vmul.f32 %v912, %v923
        %v929 = vsel %vm571, %v927, 0.0
        %v930 = vadd.f32 %v925, %v929
        %v931 = vrot.slane %v930, 4
        %v932 = vadd.f32 %v930, %v931
        %v933 = vrot.slane %v932, 2
        %v934 = vadd.f32 %v932, %v933
        %v935 = vrot.slane %v934, 1
        %v936 = vadd.f32 %v934, %v935
        %v937 = vsel %vm571, %v928, 0.0
        %v938 = vadd.f32 %v926, %v937
        %v939 = vrot.slane %v938, 4
        %v940 = vadd.f32 %v938, %v939
        %v941 = vrot.slane %v940, 2
        %v942 = vadd.f32 %v940, %v941
        %v943 = vrot.slane %v942, 1
        %v944 = vadd.f32 %v942, %v943
        %s945 = scalar_lea.vmem %s4, 20
        %v946 = vld [vmem:[%s945] ss:$8 sm:$0x3]
        %v949 = vcombine.low %v936, %v944
        %v951 = vunpack.c.l.s4 1966171168
        %v952 = vunpack.c.0.s8 %v951
        %v953 = vlaneseq
        %v954 = vshrl.u32 %v953, 7
        %v955 = vsub.s32 %v952, %v954
        %v956 = vrot.slane %v949, %v955
        %v958 = vunpack.c.l.s4 1966171168
        %v959 = vunpack.c.0.s8 %v958
        %v960 = vlaneseq
        %v961 = vshrl.u32 %v960, 7
        %v962 = vsub.s32 %v959, %v961
        %v963 = vrot.slane %v956, %v962
        %v965 = vmul.f32 %v946, %v963
        %v966 = vadd.f32 %v899, %v965
        %967 = vrot.lane.b32.xlu0 %v572, 125
        %v968 = vpop.permute.xlu0 %967
        %969 = vrot.lane.b32.xlu0 %v576, 125
        %v970 = vpop.permute.xlu0 %969
        %971 = vrot.lane.b32.xlu0 %v573, 125
        %v972 = vpop.permute.xlu0 %971
        %973 = vrot.lane.b32.xlu0 %v577, 125
        %v974 = vpop.permute.xlu0 %973
        %vm975 = vcmp.lt.s32.totalorder %v393, 125
        %v976 = vsel %vm975, %v968, %v972
        %v977 = vsel %vm975, %v970, %v974
        %v978 = vsel %vm975, %v972, %v968
        %v979 = vsel %vm975, %v974, %v970
        %v980 = vld [vmem:[%s3] sm:$0xff]
        %v981 = vld [vmem:[%s3 + $0x8] sm:$0x3f]
        %983 = vset.pattern.permute.xlu0 6
        %984 = vperm.xlu0 %983, %v980
        %v985 = vpop.permute.xlu0 %984
        %988 = vset.pattern.permute.xlu0 6
        %989 = vperm.xlu0 %988, %v981
        %v990 = vpop.permute.xlu0 %989
        %v992 = vmul.f32 %v976, %v985
        %v993 = vmul.f32 %v978, %v985
        %v994 = vmul.f32 %v977, %v990
        %v995 = vmul.f32 %v979, %v990
        %v996 = vsel %vm571, %v994, 0.0
        %v997 = vadd.f32 %v992, %v996
        %v998 = vrot.slane %v997, 4
        %v999 = vadd.f32 %v997, %v998
        %v1000 = vrot.slane %v999, 2
        %v1001 = vadd.f32 %v999, %v1000
        %v1002 = vrot.slane %v1001, 1
        %v1003 = vadd.f32 %v1001, %v1002
        %v1004 = vsel %vm571, %v995, 0.0
        %v1005 = vadd.f32 %v993, %v1004
        %v1006 = vrot.slane %v1005, 4
        %v1007 = vadd.f32 %v1005, %v1006
        %v1008 = vrot.slane %v1007, 2
        %v1009 = vadd.f32 %v1007, %v1008
        %v1010 = vrot.slane %v1009, 1
        %v1011 = vadd.f32 %v1009, %v1010
        %s1012 = scalar_lea.vmem %s4, 21
        %v1013 = vld [vmem:[%s1012] ss:$8 sm:$0x3]
        %v1016 = vcombine.low %v1003, %v1011
        %v1018 = vunpack.c.l.s4 1966171168
        %v1019 = vunpack.c.0.s8 %v1018
        %v1020 = vlaneseq
        %v1021 = vshrl.u32 %v1020, 7
        %v1022 = vsub.s32 %v1019, %v1021
        %v1023 = vrot.slane %v1016, %v1022
        %v1025 = vunpack.c.l.s4 1966171168
        %v1026 = vunpack.c.0.s8 %v1025
        %v1027 = vlaneseq
        %v1028 = vshrl.u32 %v1027, 7
        %v1029 = vsub.s32 %v1026, %v1028
        %v1030 = vrot.slane %v1023, %v1029
        %v1032 = vmul.f32 %v1013, %v1030
        %v1033 = vadd.f32 %v966, %v1032
        %v1034 = vxor.u32 %v1033, 2147483648
        %v1035 = vmul.f32 %v1034, 1.442695
        %v1036 = vpow.pop %v1035
        %v1037 = vadd.f32 %v1036, 1.0
        %v1038 = vrcp.pop %v1037
        %v1039 = vmul.f32 1.0, %v1038
        %v1041 = vlaneseq
        %v1042 = vshrl.u32 %v1041, 7
        %v1043 = vsub.s32 0, %v1042
        %v1044 = vrot.slane %v1039, %v1043
        %v1045 = vlaneseq
        %v1046 = vshrl.u32 %v1045, 7
        %v1047 = vsub.s32 1, %v1046
        %v1048 = vrot.slane %v1039, %v1047
        %v1049 = vcombine.low %v1044, %v1048
        %v1051 = vmul.f32 %v350, %v1049
        %1052 = vst [vmem:[%s240] sm:$0xff] %v1051
        %s1053 = sand.u32 %s140, 1
        %s1054 = scalar_lea.sflag [#allocation4], %s1053
        %s1055 = sand.u32 %s140, 1
        %s1056 = smul.addr %s1055, 8
        %s1057 = scalar_lea.vmem [#allocation5], %s1056
        // Predicated region
        $region45: #{tpu_custom_call.1} parent=39 // pred_check
          %p1058 = pneg %p150
        $region46: #{tpu_custom_call.1} parent=39 // pred_check_branch
          %1060 = sbr.rel (%p1058) target = $region48
        $region47: #{tpu_custom_call.1} parent=39 // pred_region
          %s1062 = ssub.s32 128, 128
          %1063 = vsyncadd %s1054, %s1062
          %s1064 = smul.addr %s22, 2
          %s1065 = smul.addr %s1064, 64
          %s1066 = scalar_lea.hbm %s5, %s1065
          %s1068 = sshll.u32 %s1057, 4
          %s1069 = int_to_ptr.vmem [resolvable:$true] %s1068
          %1071 = dma.vmem_to_hbm [thread:$0]  %s1069, 128, %s1066, %s1054
        $region48: #{tpu_custom_call.1} parent=39 // pred_fallthru
          _
      $region40: #{tpu_custom_call.1} parent=5 // pred_fallthru
        _
      %p1072 = scmp.le.s32.totalorder 2, %s17
      // Predicated region
      $region49: #{tpu_custom_call.1} parent=5 // pred_check
        %p1073 = pneg %p1072
      $region50: #{tpu_custom_call.1} parent=5 // pred_check_branch
        %1075 = sbr.rel (%p1073) target = $region52
      $region51: #{tpu_custom_call.1} parent=5 // pred_region
        %s1076 = ssub.s32 %s17, 2
        // Predicated region
        $region53: #{tpu_custom_call.1} parent=51 // pred_check
          %p1077 = pneg %p156
        $region54: #{tpu_custom_call.1} parent=51 // pred_check_branch
          %1079 = sbr.rel (%p1077) target = $region56
        $region55: #{tpu_custom_call.1} parent=51 // pred_region
          %s1080 = sand.u32 %s141, 1
          %s1081 = scalar_lea.sflag [#allocation4], %s1080
          %s1082 = sand.u32 %s141, 1
          %s1083 = smul.addr %s1082, 8
          %s1084 = scalar_lea.vmem [#allocation5], %s1083
          %1085 = dma.done %s1081, 128
        $region56: #{tpu_custom_call.1} parent=51 // pred_fallthru
          _
      $region52: #{tpu_custom_call.1} parent=5 // pred_fallthru
        _
    $region6: #{tpu_custom_call.1} parent=1 // loop_footer
      %s21 = sadd.s32 1, %s17
    $region7: #{tpu_custom_call.1} parent=1 // loop_footer_branch
      %16 = sbr.rel target = $region3
    $region8: #{tpu_custom_call.1} parent=1 // loop_exit
      _
    %1086 = vsyncpa [#allocation3], 1
    %s1087 = scalar_lea.sflag [#allocation3], 1
    %1088 = vsyncpa %s1087, 1
    %1089 = vsyncpa [#allocation4], 1
    %s1090 = scalar_lea.sflag [#allocation4], 1
    %1091 = vsyncpa %s1090, 1

</llo_original>
